<compile_context>
chip_gen: v7x
topology: tpu7x:2x2x1
jax: 0.10.0
libtpu: 0.0.40
codegen_flags: <defaults>
</compile_context>

<pallas_src>
import functools

import jax
import jax.numpy as jnp
import numpy as np
from jax.experimental import pallas as pl
from jax.experimental.pallas import tpu as pltpu


def _hinge_partial_kernel(dpos_ref, dneg_ref, out_ref, *, p_norm, margin,
                          batch, tile_b):
    """One batch tile of residuals -> (8, 128) block holding one partial sum.

    Entry [0, 0] of the block is sum_i relu(||d_pos_i||_p - ||d_neg_i||_p + m)
    over the valid rows of this tile; every other entry is zero, so the host
    side can simply jnp.sum the whole output.
    """
    i = pl.program_id(0)

    dp = dpos_ref[...]                                       # (TB, D) f32
    dn = dneg_ref[...]

    # Mask rows that are batch padding (global row index >= real batch).
    row_idx = i * tile_b + jax.lax.broadcasted_iota(jnp.int32, (tile_b, 1), 0)
    valid = row_idx < batch                                  # (TB, 1) bool

    if p_norm == 1:
        pos = jnp.sum(jnp.abs(dp), axis=1, keepdims=True)
        neg = jnp.sum(jnp.abs(dn), axis=1, keepdims=True)
    elif p_norm == 2:
        pos = jnp.sqrt(jnp.sum(dp * dp, axis=1, keepdims=True))
        neg = jnp.sqrt(jnp.sum(dn * dn, axis=1, keepdims=True))
    else:  # general p-norm
        p = float(p_norm)
        pos = jnp.power(
            jnp.sum(jnp.power(jnp.abs(dp), p), axis=1, keepdims=True), 1.0 / p)
        neg = jnp.power(
            jnp.sum(jnp.power(jnp.abs(dn), p), axis=1, keepdims=True), 1.0 / p)

    # MarginRankingLoss with y = -1: relu(pos - neg + margin); NaN-safe mask.
    hinge = jnp.where(valid, jnp.maximum(pos - neg + margin, 0.0), 0.0)
    partial = jnp.sum(hinge, keepdims=True)                  # (1, 1)

    # Tile-legal, unmasked (8, 128) store: partial in [0, 0], zeros elsewhere.
    sub = jax.lax.broadcasted_iota(jnp.int32, (8, 128), 0)
    lane = jax.lax.broadcasted_iota(jnp.int32, (8, 128), 1)
    out_ref[...] = jnp.where((sub == 0) & (lane == 0), partial, 0.0)


def _choose_tile(batch, d):
    """Pick the batch tile.

    Budget: 2 streamed inputs x 2 pipeline buffers x (tb, d) f32 under 12 MiB
    (safe w.r.t. v5e's 16 MiB default scoped-VMEM limit; fine on v6e/v7x).
    Prefer >= 8 grid steps (v7x megacore sharding + DMA/compute overlap) while
    keeping tiles >= 256 rows when the batch is large enough to amortize the
    ~0.35 us per-step overhead.
    """
    b8 = ((batch + 7) // 8) * 8
    vmem_budget = 12 * 1024 * 1024
    bytes_per_row = 2 * 2 * d * 4
    cap = max(8, min(vmem_budget // bytes_per_row, 2048))
    target = max(256, -(-b8 // 8))            # >= 8 steps once batch >= 2048
    tb = min(cap, target, b8)
    tb = max(8, (tb // 8) * 8)                # sublane-aligned
    return tb


def transe_forward(entity_w, relation_w, current_triples, corrupted_triples,
                   *, margin, norm, C):
    """entity_w: (E, D) f32, relation_w: (R, D) f32, triples: (B, 3) int32."""
    B = int(current_triples.shape[0])
    D = int(entity_w.shape[1])

    h, r, t = (current_triples[:, 0], current_triples[:, 1],
               current_triples[:, 2])
    hc, rc, tc = (corrupted_triples[:, 0], corrupted_triples[:, 1],
                  corrupted_triples[:, 2])

    ew = entity_w.astype(jnp.float32)
    rw = relation_w.astype(jnp.float32)

    # Translation residuals. The row gathers fuse (under jit) into these two
    # elementwise fusions, so only 2 x (B, D) f32 slabs feed the kernel.
    d_pos = (jnp.take(ew, h, axis=0) + jnp.take(rw, r, axis=0)
             - jnp.take(ew, t, axis=0))
    d_neg = (jnp.take(ew, hc, axis=0) + jnp.take(rw, rc, axis=0)
             - jnp.take(ew, tc, axis=0))

    tb = _choose_tile(B, D)
    Bp = ((B + tb - 1) // tb) * tb
    num_tiles = Bp // tb
    if Bp != B:
        d_pos = jnp.pad(d_pos, ((0, Bp - B), (0, 0)))
        d_neg = jnp.pad(d_neg, ((0, Bp - B), (0, 0)))

    kernel = functools.partial(_hinge_partial_kernel, p_norm=norm,
                               margin=float(margin), batch=B, tile_b=tb)

    # No D padding: last block dim equals the full array dim (legal).
    in_spec = pl.BlockSpec((tb, D), lambda i: (i, 0))
    partials = pl.pallas_call(
        kernel,
        out_shape=jax.ShapeDtypeStruct((num_tiles * 8, 128), jnp.float32),
        grid=(num_tiles,),
        in_specs=[in_spec, in_spec],
        out_specs=pl.BlockSpec((8, 128), lambda i: (i, 0)),
        compiler_params=pltpu.CompilerParams(
            dimension_semantics=("parallel",)),
    )(d_pos, d_neg)

    rank_loss = jnp.sum(partials) * (1.0 / B)

    # Norm penalty only needs per-row squared norms, so gather+square+reduce
    # fuse into B scalars per term (no (B, D) slab is ever materialized).
    def sq_rows(table, idx):
        rows = jnp.take(table, idx, axis=0)
        return jnp.sum(rows * rows, axis=1)

    ent_sq = jnp.concatenate([sq_rows(ew, h), sq_rows(ew, t),
                              sq_rows(ew, hc), sq_rows(ew, tc)])
    rel_sq = jnp.concatenate([sq_rows(rw, r), sq_rows(rw, rc)])
    ent_scale = jnp.sum(jnp.maximum(ent_sq - 1.0, 0.0))
    rel_scale = jnp.sum(jnp.maximum(rel_sq - 1.0, 0.0))

    return (rank_loss
            + float(C) * (ent_scale * (1.0 / (4.0 * B))
                          + rel_scale * (1.0 / (2.0 * B))))


def _reference(entity_w, relation_w, cur, cor, *, margin, norm, C):
    """Pure-JAX reference mirroring the PyTorch forward (norm in {1, 2})."""
    def dist(h, r, t):
        d = entity_w[h] + relation_w[r] - entity_w[t]
        if norm == 1:
            return jnp.sum(jnp.abs(d), axis=1)
        return jnp.sqrt(jnp.sum(d * d, axis=1))

    pos = dist(cur[:, 0], cur[:, 1], cur[:, 2])
    neg = dist(cor[:, 0], cor[:, 1], cor[:, 2])
    loss = jnp.mean(jnp.maximum(pos - neg + margin, 0.0))

    ent = jnp.concatenate([entity_w[cur[:, 0]], entity_w[cur[:, 2]],
                           entity_w[cor[:, 0]], entity_w[cor[:, 2]]], axis=0)
    rel = jnp.concatenate([relation_w[cur[:, 1]], relation_w[cor[:, 1]]],
                          axis=0)

    def scale(x):
        return jnp.sum(jnp.maximum(jnp.sum(x * x, axis=1) - 1.0, 0.0))

    return loss + C * (scale(ent) / ent.shape[0] + scale(rel) / rel.shape[0])


if __name__ == "__main__":
    entity_num, relation_num, dim = 32, 8, 32
    batch = 8
    margin, norm, C = 1.0, 2, 0.25

    key = jax.random.PRNGKey(0)
    k_ent, k_rel, k_h, k_r, k_t, k_hc, k_rc, k_tc = jax.random.split(key, 8)

    # xavier_uniform_ then row-wise L2 normalization (as in __data_init).
    def xavier_rows(k, n, d):
        bound = float(np.sqrt(6.0 / (n + d)))
        w = jax.random.uniform(k, (n, d), jnp.float32, -bound, bound)
        return w / jnp.sqrt(jnp.sum(w * w, axis=1, keepdims=True))

    entity_w = xavier_rows(k_ent, entity_num, dim)
    relation_w = xavier_rows(k_rel, relation_num, dim)

    current_triples = jnp.stack([
        jax.random.randint(k_h, (batch,), 0, entity_num, jnp.int32),
        jax.random.randint(k_r, (batch,), 0, relation_num, jnp.int32),
        jax.random.randint(k_t, (batch,), 0, entity_num, jnp.int32),
    ], axis=1)
    corrupted_triples = jnp.stack([
        jax.random.randint(k_hc, (batch,), 0, entity_num, jnp.int32),
        jax.random.randint(k_rc, (batch,), 0, relation_num, jnp.int32),
        jax.random.randint(k_tc, (batch,), 0, entity_num, jnp.int32),
    ], axis=1)

    fwd = jax.jit(functools.partial(transe_forward, margin=margin, norm=norm,
                                    C=C))
    out = fwd(entity_w, relation_w, current_triples, corrupted_triples)
    out = jax.block_until_ready(out)

    ref = _reference(entity_w, relation_w, current_triples, corrupted_triples,
                     margin=margin, norm=norm, C=C)
    np.testing.assert_allclose(np.asarray(out), np.asarray(ref),
                               rtol=1e-5, atol=1e-5)
    print("KERNEL_OK")
</pallas_src>

<mosaic_0001>
module attributes {stable_mosaic.version = 11 : i64} {
  func.func @_hinge_partial_kernel(%arg0: i32, %arg1: memref<8x32xf32, #tpu.memory_space<vmem>>, %arg2: memref<8x32xf32, #tpu.memory_space<vmem>>, %arg3: memref<8x128xf32, #tpu.memory_space<vmem>>) attributes {dimension_semantics = [#tpu.dimension_semantics<parallel>], iteration_bounds = array<i64: 1>, scalar_prefetch = 0 : i64, scratch_operands = 0 : i64, tpu.core_type = #tpu.core_type<tc>, window_params = [{transform_indices = @transform_0, window_bounds = array<i64: 8, 32>}, {transform_indices = @transform_1, window_bounds = array<i64: 8, 32>}, {transform_indices = @transform_2, window_bounds = array<i64: 8, 128>}]} {
    %c0 = arith.constant 0 : index
    %c0_0 = arith.constant 0 : index
    %0 = vector.load %arg1[%c0, %c0_0] : memref<8x32xf32, #tpu.memory_space<vmem>>, vector<8x32xf32>
    %c0_1 = arith.constant 0 : index
    %c0_2 = arith.constant 0 : index
    %1 = vector.load %arg2[%c0_1, %c0_2] : memref<8x32xf32, #tpu.memory_space<vmem>>, vector<8x32xf32>
    %c8_i32 = arith.constant 8 : i32
    %2 = arith.muli %arg0, %c8_i32 : i32
    %3 = tpu.iota {dimensions = array<i32: 0>} : vector<8x1xi32>
    %4 = vector.broadcast %2 : i32 to vector<8x1xi32>
    %5 = arith.addi %4, %3 : vector<8x1xi32>
    %c8_i32_3 = arith.constant 8 : i32
    %6 = vector.broadcast %c8_i32_3 : i32 to vector<8x1xi32>
    %7 = arith.cmpi slt, %5, %6 : vector<8x1xi32>
    %8 = arith.mulf %0, %0 : vector<8x32xf32>
    %cst = arith.constant dense<0.000000e+00> : vector<8xf32>
    %9 = vector.multi_reduction <add>, %8, %cst [1] : vector<8x32xf32> to vector<8xf32>
    %10 = vector.shape_cast %9 : vector<8xf32> to vector<8x1xf32>
    %11 = math.sqrt %10 : vector<8x1xf32>
    %12 = arith.mulf %1, %1 : vector<8x32xf32>
    %cst_4 = arith.constant dense<0.000000e+00> : vector<8xf32>
    %13 = vector.multi_reduction <add>, %12, %cst_4 [1] : vector<8x32xf32> to vector<8xf32>
    %14 = vector.shape_cast %13 : vector<8xf32> to vector<8x1xf32>
    %15 = math.sqrt %14 : vector<8x1xf32>
    %16 = arith.subf %11, %15 : vector<8x1xf32>
    %cst_5 = arith.constant 1.000000e+00 : f32
    %17 = vector.broadcast %cst_5 : f32 to vector<8x1xf32>
    %18 = arith.addf %16, %17 : vector<8x1xf32>
    %cst_6 = arith.constant 0.000000e+00 : f32
    %19 = vector.broadcast %cst_6 : f32 to vector<8x1xf32>
    %20 = arith.maximumf %18, %19 : vector<8x1xf32>
    %cst_7 = arith.constant 0.000000e+00 : f32
    %21 = vector.broadcast %cst_7 : f32 to vector<8x1xf32>
    %22 = arith.select %7, %20, %21 : vector<8x1xi1>, vector<8x1xf32>
    %23 = vector.shape_cast %22 : vector<8x1xf32> to vector<1x8x1xf32>
    %cst_8 = arith.constant dense<0.000000e+00> : vector<1xf32>
    %24 = vector.multi_reduction <add>, %23, %cst_8 [1, 2] : vector<1x8x1xf32> to vector<1xf32>
    %25 = vector.shape_cast %24 : vector<1xf32> to vector<1x1x1xf32>
    %26 = vector.extract %25[0, 0, 0] : f32 from vector<1x1x1xf32>
    %27 = vector.broadcast %26 : f32 to vector<1x1xf32>
    %28 = tpu.iota {dimensions = array<i32: 0>} : vector<8x128xi32>
    %29 = tpu.iota {dimensions = array<i32: 1>} : vector<8x128xi32>
    %c0_i32 = arith.constant 0 : i32
    %30 = vector.broadcast %c0_i32 : i32 to vector<8x128xi32>
    %31 = arith.cmpi eq, %28, %30 : vector<8x128xi32>
    %c0_i32_9 = arith.constant 0 : i32
    %32 = vector.broadcast %c0_i32_9 : i32 to vector<8x128xi32>
    %33 = arith.cmpi eq, %29, %32 : vector<8x128xi32>
    %34 = arith.andi %31, %33 : vector<8x128xi1>
    %cst_10 = arith.constant 0.000000e+00 : f32
    %35 = vector.shape_cast %27 : vector<1x1xf32> to vector<1x1xf32>
    %36 = vector.broadcast %35 : vector<1x1xf32> to vector<8x128xf32>
    %37 = vector.broadcast %cst_10 : f32 to vector<8x128xf32>
    %38 = arith.select %34, %36, %37 : vector<8x128xi1>, vector<8x128xf32>
    %c0_11 = arith.constant 0 : index
    %c0_12 = arith.constant 0 : index
    %39 = vector.load %arg3[%c0_11, %c0_12] : memref<8x128xf32, #tpu.memory_space<vmem>>, vector<8x128xf32>
    tpu.vector_store %arg3[%c0_11, %c0_12], %38 {strides = array<i32>} : memref<8x128xf32, #tpu.memory_space<vmem>>, vector<8x128xf32>,
    return
  }
  func.func @transform_0(%arg0: i32) -> (i32, i32) {
    %c0_i32 = arith.constant 0 : i32
    %c0_i32_0 = arith.constant 0 : i32
    return %arg0, %c0_i32 : i32, i32
  }
  func.func @transform_1(%arg0: i32) -> (i32, i32) {
    %c0_i32 = arith.constant 0 : i32
    %c0_i32_0 = arith.constant 0 : i32
    return %arg0, %c0_i32 : i32, i32
  }
  func.func @transform_2(%arg0: i32) -> (i32, i32) {
    %c0_i32 = arith.constant 0 : i32
    %c0_i32_0 = arith.constant 0 : i32
    return %arg0, %c0_i32 : i32, i32
  }
}

</mosaic_0001>

<llo_original>
// kernel: transe_forward.1
$region0: #{transe_forward.1}
  #allocation0 [shape = 'u32[]', space=smem, size = 0x4, offset = 0x4, fixed_abs, tag = 'smem constant byte address 0x4 - core index']
  #allocation1 [shape = 'u32[144,128]{1,0:T(1,128)}', space=vmem, size = 0x12000, scoped, tag = 'internal scratch']
  %s0 = inlined_call_operand.vmem [shape: f32[8,32], index: 0, kind: input, shape index: {}]
  %s1 = inlined_call_operand.vmem [shape: f32[8,32], index: 1, kind: input, shape index: {}]
  %s2 = inlined_call_operand.vmem [shape: f32[8,128], index: 2, kind: output, shape index: {}]
  %s3 = sld [smem:[#allocation0]]
  $region18: #{transe_forward.1} parent=0
    _
  %s5 = ssub.s32 1, %s3
  %s6 = scalar_select 0, %s5, %s3
  // Predicated region
  $region2: #{transe_forward.1} parent=0 // pred_check
    _
  $region3: #{transe_forward.1} parent=0 // pred_check_branch
    %8 = sbr.rel (0) target = $region5
  $region4: #{transe_forward.1} parent=0 // pred_region
    _
  $region5: #{transe_forward.1} parent=0 // pred_fallthru
    _
  // Predicated region
  $region6: #{transe_forward.1} parent=0 // pred_check
    _
  $region7: #{transe_forward.1} parent=0 // pred_check_branch
    %10 = sbr.rel (0) target = $region9
  $region8: #{transe_forward.1} parent=0 // pred_region
    _
  $region9: #{transe_forward.1} parent=0 // pred_fallthru
    _
  %v11 = vld [vmem:[%s0] sm:$0xff]
  %v12 = vld [vmem:[%s1] sm:$0xff]
  %s13 = smul.u32 0, 8
  %v14 = vlaneseq
  %v15 = vshrl.u32 %v14, 7
  %v16 = vstv %s13
  %v17 = vadd.s32 %v16, %v15
  %vm18 = vcmp.lt.s32.totalorder %v17, 8
  %v19 = vmul.f32 %v11, %v11
  %vm20 = vcmask 261120
  %v21 = vsel %vm20, %v19, 0.0
  %22 = vadd.xlane.f32.xlu0 %v21
  %v23 = vpop.xlane.xlu0 %22
  %v24 = vrsqrt.pop %v23
  %v25 = vmul.f32 %v23, %v24
  %vm26 = vcmp.eq.f32.partialorder %v23, inf
  %v27 = vsel %vm26, %v23, %v25
  %vm28 = vcmp.eq.f32.partialorder %v23, 0.0
  %v29 = vand.u32 %v23, 2147483648
  %v30 = vsel %vm28, %v29, %v27
  %v31 = vmul.f32 %v12, %v12
  %v32 = vsel %vm20, %v31, 0.0
  %33 = vadd.xlane.f32.xlu0 %v32
  %v34 = vpop.xlane.xlu0 %33
  %v35 = vrsqrt.pop %v34
  %v36 = vmul.f32 %v34, %v35
  %vm37 = vcmp.eq.f32.partialorder %v34, inf
  %v38 = vsel %vm37, %v34, %v36
  %vm39 = vcmp.eq.f32.partialorder %v34, 0.0
  %v40 = vand.u32 %v34, 2147483648
  %v41 = vsel %vm39, %v40, %v38
  %v42 = vsub.f32 %v30, %v41
  %v43 = vadd.f32 %v42, 1.0
  %v44 = vmax.f32 %v43, 0.0
  %v45 = vsel %vm18, %v44, 0.0
  %vm46 = vcmask 7168
  %v47 = vsel %vm46, %v45, 0.0
  %48 = vadd.xlane.f32.xlu0 %v47
  %v49 = vpop.xlane.xlu0 %48
  %v50 = vrot.slane %v49, 4
  %v51 = vadd.f32 %v49, %v50
  %v52 = vrot.slane %v51, 2
  %v53 = vadd.f32 %v51, %v52
  %v54 = vrot.slane %v53, 1
  %v55 = vadd.f32 %v53, %v54
  %s56 = vtos %v55
  %v57 = vlaneseq
  %v58 = vand.u32 %v57, 127
  %vm59 = vcmp.eq.s32.totalorder %v15, 0
  %vm60 = vcmp.eq.s32.totalorder %v58, 0
  %vm61 = vmand %vm59, %vm60
  %v62 = vstv %s56
  %v63 = vsel %vm61, %v62, 0.0
  %64 = vst [vmem:[%s2] sm:$0xff] %v63
  // Predicated region
  $region10: #{transe_forward.1} parent=0 // pred_check
    _
  $region11: #{transe_forward.1} parent=0 // pred_check_branch
    %66 = sbr.rel (0) target = $region13
  $region12: #{transe_forward.1} parent=0 // pred_region
    _
  $region13: #{transe_forward.1} parent=0 // pred_fallthru
    _
  // Predicated region
  $region14: #{transe_forward.1} parent=0 // pred_check
    _
  $region15: #{transe_forward.1} parent=0 // pred_check_branch
    %68 = sbr.rel (0) target = $region17
  $region16: #{transe_forward.1} parent=0 // pred_region
    _
  $region17: #{transe_forward.1} parent=0 // pred_fallthru
    _

</llo_original>
